<compile_context>
chip_gen: v7x
topology: tpu7x:2x2x1
jax: 0.10.0
libtpu: 0.0.40
codegen_flags: <defaults>
</compile_context>

<pallas_src>
import functools

import jax
import jax.numpy as jnp
from jax.experimental import pallas as pl
from jax.experimental.pallas import tpu as pltpu

# TODO(synk): len(task_label_mapping) depends on the TaskType enum (not
# provided); using 4 classes as a placeholder.
NUM_CLASSES = 4

IN_DIM = 5
H1 = 128
H2 = 64


def _round_up(n, m):
    return ((n + m - 1) // m) * m


def _mlp_kernel(x_ref, w1_ref, b1_ref, w2_ref, b2_ref, w3_ref, b3_ref, o_ref):
    x = x_ref[...]                                     # (TB, 5) f32
    tb = x.shape[0]

    # ---- fc1 + relu : K=5 -> VPU broadcast-FMA (MXU would be ~2-4% utilized).
    h1 = jnp.broadcast_to(b1_ref[...], (tb, H1))       # (TB, 128)
    for k in range(IN_DIM):                            # static unroll (5 FMAs)
        h1 = h1 + x[:, k:k + 1] * w1_ref[k:k + 1, :]
    h1 = jnp.maximum(h1, 0.0)

    # ---- fc2 + relu : the one MXU-worthy GEMM; bf16 operands, f32 accumulate.
    h2 = jnp.dot(h1.astype(jnp.bfloat16),
                 w2_ref[...],                          # already bf16
                 preferred_element_type=jnp.float32) + b2_ref[...]
    h2 = jnp.maximum(h2, 0.0)                          # (TB, 64) f32

    # ---- fc3 : small (64 -> NUM_CLASSES); f32 for logit accuracy.
    logits = jnp.dot(h2, w3_ref[...],
                     preferred_element_type=jnp.float32) + b3_ref[...]

    # ---- softmax over dim=1 (numerically stable); divide on the EUP slot.
    m = jnp.max(logits, axis=1, keepdims=True)
    e = jnp.exp(logits - m)
    denom = jnp.sum(e, axis=1, keepdims=True)
    o_ref[...] = (e * pl.reciprocal(denom, approx=True)).astype(o_ref.dtype)


@functools.partial(jax.jit, static_argnames=("tb",))
def core_ai_model_forward(x, params, tb=2048):
    """x: (B, 5) float32; params: dict of w1,b1,w2,b2,w3,b3 (all float32)."""
    B = x.shape[0]
    w1, b1 = params["w1"], params["b1"]
    w2, b2 = params["w2"], params["b2"]
    w3, b3 = params["w3"], params["b3"]

    # Cast the fc2 weight once in the wrapper: halves its DMA bytes and moves
    # the cast out of the per-tile kernel body.
    w2_bf16 = w2.astype(jnp.bfloat16)

    # Batch tile: large (VMEM-cheap: (TB,128) f32 ~= 1 MiB at TB=2048) but
    # clamped to the (8-aligned) batch for small inputs.
    TB = min(tb, _round_up(B, 8))
    padded_B = _round_up(B, TB)
    if padded_B != B:
        x = jnp.pad(x, ((0, padded_B - B), (0, 0)))
    grid = (padded_B // TB,)

    tiled = lambda shape: pl.BlockSpec(shape, lambda i: (i, 0))   # moves with grid
    fixed = lambda shape: pl.BlockSpec(shape, lambda i: (0, 0))   # VMEM-resident

    out = pl.pallas_call(
        _mlp_kernel,
        out_shape=jax.ShapeDtypeStruct((padded_B, NUM_CLASSES), jnp.float32),
        grid_spec=pltpu.PrefetchScalarGridSpec(
            num_scalar_prefetch=0,
            grid=grid,
            in_specs=[
                tiled((TB, IN_DIM)),
                fixed((IN_DIM, H1)),
                fixed((1, H1)),
                fixed((H1, H2)),
                fixed((1, H2)),
                fixed((H2, NUM_CLASSES)),
                fixed((1, NUM_CLASSES)),
            ],
            out_specs=tiled((TB, NUM_CLASSES)),
        ),
        compiler_params=pltpu.CompilerParams(
            # Batch tiles are independent -> shard across both TCs on v7x.
            dimension_semantics=("parallel",),
        ),
    )(x, w1, b1, w2_bf16, b2, w3, b3)

    return out[:B]


def init_params(key):
    """Deterministic init mimicking nn.Linear default (uniform +-1/sqrt(fan_in))."""
    ks = jax.random.split(key, 6)

    def linear(kw, kb, fan_in, fan_out):
        bound = 1.0 / jnp.sqrt(jnp.float32(fan_in))
        w = jax.random.uniform(kw, (fan_in, fan_out), jnp.float32, -bound, bound)
        b = jax.random.uniform(kb, (1, fan_out), jnp.float32, -bound, bound)
        return w, b

    w1, b1 = linear(ks[0], ks[1], IN_DIM, H1)
    w2, b2 = linear(ks[2], ks[3], H1, H2)
    w3, b3 = linear(ks[4], ks[5], H2, NUM_CLASSES)
    return {"w1": w1, "b1": b1, "w2": w2, "b2": b2, "w3": w3, "b3": b3}


def _reference(x, p):
    h1 = jnp.maximum(x @ p["w1"] + p["b1"], 0.0)
    h2 = jnp.maximum(h1 @ p["w2"] + p["b2"], 0.0)
    logits = h2 @ p["w3"] + p["b3"]
    return jax.nn.softmax(logits, axis=1)


if __name__ == "__main__":
    key = jax.random.PRNGKey(0)
    k_params, k_x1, k_x2 = jax.random.split(key, 3)
    params = init_params(k_params)

    ok = True
    # B=8 (tile == batch) and B=20 (exercises the padding path, TB=24 > B).
    for k_x, B in ((k_x1, 8), (k_x2, 20)):
        x = jax.random.normal(k_x, (B, IN_DIM), dtype=jnp.float32)
        out = jax.block_until_ready(core_ai_model_forward(x, params))
        ref = _reference(x, params)

        assert out.shape == (B, NUM_CLASSES)
        row_sums = jnp.sum(out, axis=1)
        ok &= bool(jnp.all(jnp.abs(row_sums - 1.0) < 1e-2))        # approx recip
        ok &= bool(jnp.all(jnp.abs(out - ref) < 5e-2))             # bf16 fc2

    if ok:
        print("KERNEL_OK")
</pallas_src>

<mosaic_0001>
module attributes {stable_mosaic.version = 11 : i64} {
  func.func @_mlp_kernel(%arg0: i32, %arg1: memref<8x5xf32, #tpu.memory_space<vmem>>, %arg2: memref<5x128xf32, #tpu.memory_space<vmem>>, %arg3: memref<1x128xf32, #tpu.memory_space<vmem>>, %arg4: memref<128x64xbf16, #tpu.memory_space<vmem>>, %arg5: memref<1x64xf32, #tpu.memory_space<vmem>>, %arg6: memref<64x4xf32, #tpu.memory_space<vmem>>, %arg7: memref<1x4xf32, #tpu.memory_space<vmem>>, %arg8: memref<8x4xf32, #tpu.memory_space<vmem>>) attributes {dimension_semantics = [#tpu.dimension_semantics<parallel>], iteration_bounds = array<i64: 1>, scalar_prefetch = 0 : i64, scratch_operands = 0 : i64, tpu.core_type = #tpu.core_type<tc>, window_params = [{transform_indices = @transform_0, window_bounds = array<i64: 8, 5>}, {pipeline_mode = #tpu.pipeline_mode<synchronous>, transform_indices = @transform_1, window_bounds = array<i64: 5, 128>}, {pipeline_mode = #tpu.pipeline_mode<synchronous>, transform_indices = @transform_2, window_bounds = array<i64: 1, 128>}, {pipeline_mode = #tpu.pipeline_mode<synchronous>, transform_indices = @transform_3, window_bounds = array<i64: 128, 64>}, {pipeline_mode = #tpu.pipeline_mode<synchronous>, transform_indices = @transform_4, window_bounds = array<i64: 1, 64>}, {pipeline_mode = #tpu.pipeline_mode<synchronous>, transform_indices = @transform_5, window_bounds = array<i64: 64, 4>}, {pipeline_mode = #tpu.pipeline_mode<synchronous>, transform_indices = @transform_6, window_bounds = array<i64: 1, 4>}, {transform_indices = @transform_7, window_bounds = array<i64: 8, 4>}]} {
    %c0 = arith.constant 0 : index
    %c0_0 = arith.constant 0 : index
    %0 = vector.load %arg1[%c0, %c0_0] : memref<8x5xf32, #tpu.memory_space<vmem>>, vector<8x5xf32>
    %c0_1 = arith.constant 0 : index
    %c0_2 = arith.constant 0 : index
    %1 = vector.load %arg3[%c0_1, %c0_2] : memref<1x128xf32, #tpu.memory_space<vmem>>, vector<1x128xf32>
    %2 = vector.shape_cast %1 : vector<1x128xf32> to vector<1x128xf32>
    %3 = vector.broadcast %2 : vector<1x128xf32> to vector<8x128xf32>
    %4 = vector.extract_strided_slice %0 {offsets = [0, 0], sizes = [8, 1], strides = [1, 1]} : vector<8x5xf32> to vector<8x1xf32>
    %c0_3 = arith.constant 0 : index
    %c0_4 = arith.constant 0 : index
    %5 = vector.load %arg2[%c0_3, %c0_4] : memref<5x128xf32, #tpu.memory_space<vmem>>, vector<1x128xf32>
    %6 = vector.broadcast %4 : vector<8x1xf32> to vector<8x128xf32>
    %7 = vector.broadcast %5 : vector<1x128xf32> to vector<8x128xf32>
    %8 = arith.mulf %6, %7 : vector<8x128xf32>
    %9 = arith.addf %3, %8 : vector<8x128xf32>
    %10 = vector.extract_strided_slice %0 {offsets = [0, 1], sizes = [8, 1], strides = [1, 1]} : vector<8x5xf32> to vector<8x1xf32>
    %c1 = arith.constant 1 : index
    %c0_5 = arith.constant 0 : index
    %11 = vector.load %arg2[%c1, %c0_5] : memref<5x128xf32, #tpu.memory_space<vmem>>, vector<1x128xf32>
    %12 = vector.broadcast %10 : vector<8x1xf32> to vector<8x128xf32>
    %13 = vector.broadcast %11 : vector<1x128xf32> to vector<8x128xf32>
    %14 = arith.mulf %12, %13 : vector<8x128xf32>
    %15 = arith.addf %9, %14 : vector<8x128xf32>
    %16 = vector.extract_strided_slice %0 {offsets = [0, 2], sizes = [8, 1], strides = [1, 1]} : vector<8x5xf32> to vector<8x1xf32>
    %c2 = arith.constant 2 : index
    %c0_6 = arith.constant 0 : index
    %17 = vector.load %arg2[%c2, %c0_6] : memref<5x128xf32, #tpu.memory_space<vmem>>, vector<1x128xf32>
    %18 = vector.broadcast %16 : vector<8x1xf32> to vector<8x128xf32>
    %19 = vector.broadcast %17 : vector<1x128xf32> to vector<8x128xf32>
    %20 = arith.mulf %18, %19 : vector<8x128xf32>
    %21 = arith.addf %15, %20 : vector<8x128xf32>
    %22 = vector.extract_strided_slice %0 {offsets = [0, 3], sizes = [8, 1], strides = [1, 1]} : vector<8x5xf32> to vector<8x1xf32>
    %c3 = arith.constant 3 : index
    %c0_7 = arith.constant 0 : index
    %23 = vector.load %arg2[%c3, %c0_7] : memref<5x128xf32, #tpu.memory_space<vmem>>, vector<1x128xf32>
    %24 = vector.broadcast %22 : vector<8x1xf32> to vector<8x128xf32>
    %25 = vector.broadcast %23 : vector<1x128xf32> to vector<8x128xf32>
    %26 = arith.mulf %24, %25 : vector<8x128xf32>
    %27 = arith.addf %21, %26 : vector<8x128xf32>
    %28 = vector.extract_strided_slice %0 {offsets = [0, 4], sizes = [8, 1], strides = [1, 1]} : vector<8x5xf32> to vector<8x1xf32>
    %c4 = arith.constant 4 : index
    %c0_8 = arith.constant 0 : index
    %29 = vector.load %arg2[%c4, %c0_8] : memref<5x128xf32, #tpu.memory_space<vmem>>, vector<1x128xf32>
    %30 = vector.broadcast %28 : vector<8x1xf32> to vector<8x128xf32>
    %31 = vector.broadcast %29 : vector<1x128xf32> to vector<8x128xf32>
    %32 = arith.mulf %30, %31 : vector<8x128xf32>
    %33 = arith.addf %27, %32 : vector<8x128xf32>
    %cst = arith.constant 0.000000e+00 : f32
    %34 = vector.broadcast %cst : f32 to vector<8x128xf32>
    %35 = arith.maximumf %33, %34 : vector<8x128xf32>
    %36 = arith.truncf %35 : vector<8x128xf32> to vector<8x128xbf16>
    %c0_9 = arith.constant 0 : index
    %c0_10 = arith.constant 0 : index
    %37 = vector.load %arg4[%c0_9, %c0_10] : memref<128x64xbf16, #tpu.memory_space<vmem>>, vector<128x64xbf16>
    %cst_11 = arith.constant dense<0.000000e+00> : vector<8x64xf32>
    %38 = tpu.matmul %36, %37, %cst_11 {dimension_numbers = #tpu.dot_dimension_numbers<[1], [0], [0], [1], [0, 0, 1, 1], [], []>} : vector<8x128xbf16>, vector<128x64xbf16>, vector<8x64xf32> -> vector<8x64xf32>
    %c0_12 = arith.constant 0 : index
    %c0_13 = arith.constant 0 : index
    %39 = vector.load %arg5[%c0_12, %c0_13] : memref<1x64xf32, #tpu.memory_space<vmem>>, vector<1x64xf32>
    %40 = vector.broadcast %39 : vector<1x64xf32> to vector<8x64xf32>
    %41 = arith.addf %38, %40 : vector<8x64xf32>
    %cst_14 = arith.constant 0.000000e+00 : f32
    %42 = vector.broadcast %cst_14 : f32 to vector<8x64xf32>
    %43 = arith.maximumf %41, %42 : vector<8x64xf32>
    %c0_15 = arith.constant 0 : index
    %c0_16 = arith.constant 0 : index
    %44 = vector.load %arg6[%c0_15, %c0_16] : memref<64x4xf32, #tpu.memory_space<vmem>>, vector<64x4xf32>
    %cst_17 = arith.constant dense<0.000000e+00> : vector<8x4xf32>
    %45 = tpu.matmul %43, %44, %cst_17 {dimension_numbers = #tpu.dot_dimension_numbers<[1], [0], [0], [1], [0, 0, 1, 1], [], []>} : vector<8x64xf32>, vector<64x4xf32>, vector<8x4xf32> -> vector<8x4xf32>
    %c0_18 = arith.constant 0 : index
    %c0_19 = arith.constant 0 : index
    %46 = vector.load %arg7[%c0_18, %c0_19] : memref<1x4xf32, #tpu.memory_space<vmem>>, vector<1x4xf32>
    %47 = vector.broadcast %46 : vector<1x4xf32> to vector<8x4xf32>
    %48 = arith.addf %45, %47 : vector<8x4xf32>
    %cst_20 = arith.constant dense<0xFF800000> : vector<8xf32>
    %49 = vector.multi_reduction <maximumf>, %48, %cst_20 [1] : vector<8x4xf32> to vector<8xf32>
    %50 = vector.shape_cast %49 : vector<8xf32> to vector<8x1xf32>
    %51 = vector.broadcast %50 : vector<8x1xf32> to vector<8x4xf32>
    %52 = arith.subf %48, %51 : vector<8x4xf32>
    %53 = math.exp %52 : vector<8x4xf32>
    %cst_21 = arith.constant dense<0.000000e+00> : vector<8xf32>
    %54 = vector.multi_reduction <add>, %53, %cst_21 [1] : vector<8x4xf32> to vector<8xf32>
    %55 = vector.shape_cast %54 : vector<8xf32> to vector<8x1xf32>
    %56 = tpu.reciprocal %55 {approx = true} : vector<8x1xf32> -> vector<8x1xf32>
    %57 = vector.broadcast %56 : vector<8x1xf32> to vector<8x4xf32>
    %58 = arith.mulf %53, %57 : vector<8x4xf32>
    %c0_22 = arith.constant 0 : index
    %c0_23 = arith.constant 0 : index
    %59 = vector.load %arg8[%c0_22, %c0_23] : memref<8x4xf32, #tpu.memory_space<vmem>>, vector<8x4xf32>
    tpu.vector_store %arg8[%c0_22, %c0_23], %58 {strides = array<i32>} : memref<8x4xf32, #tpu.memory_space<vmem>>, vector<8x4xf32>,
    return
  }
  func.func @transform_0(%arg0: i32) -> (i32, i32) {
    %c0_i32 = arith.constant 0 : i32
    %c0_i32_0 = arith.constant 0 : i32
    return %arg0, %c0_i32 : i32, i32
  }
  func.func @transform_1(%arg0: i32) -> (i32, i32) {
    %c0_i32 = arith.constant 0 : i32
    %c0_i32_0 = arith.constant 0 : i32
    %c0_i32_1 = arith.constant 0 : i32
    return %c0_i32, %c0_i32_0 : i32, i32
  }
  func.func @transform_2(%arg0: i32) -> (i32, i32) {
    %c0_i32 = arith.constant 0 : i32
    %c0_i32_0 = arith.constant 0 : i32
    %c0_i32_1 = arith.constant 0 : i32
    return %c0_i32, %c0_i32_0 : i32, i32
  }
  func.func @transform_3(%arg0: i32) -> (i32, i32) {
    %c0_i32 = arith.constant 0 : i32
    %c0_i32_0 = arith.constant 0 : i32
    %c0_i32_1 = arith.constant 0 : i32
    return %c0_i32, %c0_i32_0 : i32, i32
  }
  func.func @transform_4(%arg0: i32) -> (i32, i32) {
    %c0_i32 = arith.constant 0 : i32
    %c0_i32_0 = arith.constant 0 : i32
    %c0_i32_1 = arith.constant 0 : i32
    return %c0_i32, %c0_i32_0 : i32, i32
  }
  func.func @transform_5(%arg0: i32) -> (i32, i32) {
    %c0_i32 = arith.constant 0 : i32
    %c0_i32_0 = arith.constant 0 : i32
    %c0_i32_1 = arith.constant 0 : i32
    return %c0_i32, %c0_i32_0 : i32, i32
  }
  func.func @transform_6(%arg0: i32) -> (i32, i32) {
    %c0_i32 = arith.constant 0 : i32
    %c0_i32_0 = arith.constant 0 : i32
    %c0_i32_1 = arith.constant 0 : i32
    return %c0_i32, %c0_i32_0 : i32, i32
  }
  func.func @transform_7(%arg0: i32) -> (i32, i32) {
    %c0_i32 = arith.constant 0 : i32
    %c0_i32_0 = arith.constant 0 : i32
    return %arg0, %c0_i32 : i32, i32
  }
}

</mosaic_0001>

<llo_original>
// kernel: core_ai_model_forward.1
$region0: #{core_ai_model_forward.1}
  #allocation0 [shape = 'u32[]', space=smem, size = 0x4, offset = 0x4, fixed_abs, tag = 'smem constant byte address 0x4 - core index']
  #allocation1 [shape = 'u32[144,128]{1,0:T(1,128)}', space=vmem, size = 0x12000, scoped, tag = 'internal scratch']
  %s0 = inlined_call_operand.vmem [shape: f32[8,5], index: 0, kind: input, shape index: {}]
  %s1 = inlined_call_operand.vmem [shape: f32[5,128], index: 1, kind: input, shape index: {}]
  %s2 = inlined_call_operand.vmem [shape: f32[1,128], index: 2, kind: input, shape index: {}]
  %s3 = inlined_call_operand.vmem [shape: bf16[128,64], index: 3, kind: input, shape index: {}]
  %s4 = inlined_call_operand.vmem [shape: f32[1,64], index: 4, kind: input, shape index: {}]
  %s5 = inlined_call_operand.vmem [shape: f32[64,4], index: 5, kind: input, shape index: {}]
  %s6 = inlined_call_operand.vmem [shape: f32[1,4], index: 6, kind: input, shape index: {}]
  %s7 = inlined_call_operand.vmem [shape: f32[8,4], index: 7, kind: output, shape index: {}]
  %s8 = sld [smem:[#allocation0]]
  $region38: #{core_ai_model_forward.1} parent=0
    _
  %s10 = ssub.s32 1, %s8
  %s11 = scalar_select 0, %s10, %s8
  // Predicated region
  $region2: #{core_ai_model_forward.1} parent=0 // pred_check
    _
  $region3: #{core_ai_model_forward.1} parent=0 // pred_check_branch
    %13 = sbr.rel (0) target = $region5
  $region4: #{core_ai_model_forward.1} parent=0 // pred_region
    _
  $region5: #{core_ai_model_forward.1} parent=0 // pred_fallthru
    _
  // Predicated region
  $region6: #{core_ai_model_forward.1} parent=0 // pred_check
    _
  $region7: #{core_ai_model_forward.1} parent=0 // pred_check_branch
    %15 = sbr.rel (0) target = $region9
  $region8: #{core_ai_model_forward.1} parent=0 // pred_region
    _
  $region9: #{core_ai_model_forward.1} parent=0 // pred_fallthru
    _
  // Predicated region
  $region10: #{core_ai_model_forward.1} parent=0 // pred_check
    _
  $region11: #{core_ai_model_forward.1} parent=0 // pred_check_branch
    %17 = sbr.rel (0) target = $region13
  $region12: #{core_ai_model_forward.1} parent=0 // pred_region
    _
  $region13: #{core_ai_model_forward.1} parent=0 // pred_fallthru
    _
  // Predicated region
  $region14: #{core_ai_model_forward.1} parent=0 // pred_check
    _
  $region15: #{core_ai_model_forward.1} parent=0 // pred_check_branch
    %19 = sbr.rel (0) target = $region17
  $region16: #{core_ai_model_forward.1} parent=0 // pred_region
    _
  $region17: #{core_ai_model_forward.1} parent=0 // pred_fallthru
    _
  // Predicated region
  $region18: #{core_ai_model_forward.1} parent=0 // pred_check
    _
  $region19: #{core_ai_model_forward.1} parent=0 // pred_check_branch
    %21 = sbr.rel (0) target = $region21
  $region20: #{core_ai_model_forward.1} parent=0 // pred_region
    _
  $region21: #{core_ai_model_forward.1} parent=0 // pred_fallthru
    _
  // Predicated region
  $region22: #{core_ai_model_forward.1} parent=0 // pred_check
    _
  $region23: #{core_ai_model_forward.1} parent=0 // pred_check_branch
    %23 = sbr.rel (0) target = $region25
  $region24: #{core_ai_model_forward.1} parent=0 // pred_region
    _
  $region25: #{core_ai_model_forward.1} parent=0 // pred_fallthru
    _
  // Predicated region
  $region26: #{core_ai_model_forward.1} parent=0 // pred_check
    _
  $region27: #{core_ai_model_forward.1} parent=0 // pred_check_branch
    %25 = sbr.rel (0) target = $region29
  $region28: #{core_ai_model_forward.1} parent=0 // pred_region
    _
  $region29: #{core_ai_model_forward.1} parent=0 // pred_fallthru
    _
  %v27 = vld [vmem:[%s0] sm:$0xff]
  %v28 = vld [vmem:[%s2] sm:$0x1]
  %v30 = vlaneseq
  %v31 = vshrl.u32 %v30, 7
  %v32 = vsub.s32 0, %v31
  %v33 = vrot.slane %v28, %v32
  %v35 = vld [vmem:[%s1] sm:$0x1]
  %37 = vset.pattern.permute.xlu0 0
  %38 = vperm.xlu0 %37, %v27
  %v39 = vpop.permute.xlu0 %38
  %v41 = vlaneseq
  %v42 = vshrl.u32 %v41, 7
  %v43 = vsub.s32 0, %v42
  %v44 = vrot.slane %v35, %v43
  %v45 = vmul.f32 %v39, %v44
  %v46 = vadd.f32 %v33, %v45
  %v47 = vld [vmem:[%s1 + $0x1] sm:$0x1]
  %48 = vset.pattern.permute.xlu0 1
  %49 = vperm.xlu0 %48, %v27
  %v50 = vpop.permute.xlu0 %49
  %v52 = vlaneseq
  %v53 = vshrl.u32 %v52, 7
  %v54 = vsub.s32 0, %v53
  %v55 = vrot.slane %v47, %v54
  %v56 = vmul.f32 %v50, %v55
  %v57 = vadd.f32 %v46, %v56
  %v58 = vld [vmem:[%s1 + $0x2] sm:$0x1]
  %59 = vset.pattern.permute.xlu0 2
  %60 = vperm.xlu0 %59, %v27
  %v61 = vpop.permute.xlu0 %60
  %v63 = vlaneseq
  %v64 = vshrl.u32 %v63, 7
  %v65 = vsub.s32 0, %v64
  %v66 = vrot.slane %v58, %v65
  %v67 = vmul.f32 %v61, %v66
  %v68 = vadd.f32 %v57, %v67
  %v69 = vld [vmem:[%s1 + $0x3] sm:$0x1]
  %70 = vset.pattern.permute.xlu0 3
  %71 = vperm.xlu0 %70, %v27
  %v72 = vpop.permute.xlu0 %71
  %v74 = vlaneseq
  %v75 = vshrl.u32 %v74, 7
  %v76 = vsub.s32 0, %v75
  %v77 = vrot.slane %v69, %v76
  %v78 = vmul.f32 %v72, %v77
  %v79 = vadd.f32 %v68, %v78
  %v80 = vld [vmem:[%s1 + $0x4] sm:$0x1]
  %81 = vset.pattern.permute.xlu0 4
  %82 = vperm.xlu0 %81, %v27
  %v83 = vpop.permute.xlu0 %82
  %v85 = vlaneseq
  %v86 = vshrl.u32 %v85, 7
  %v87 = vsub.s32 0, %v86
  %v88 = vrot.slane %v80, %v87
  %v89 = vmul.f32 %v83, %v88
  %v90 = vadd.f32 %v79, %v89
  %v91 = vmax.f32 %v90, 0.0
  %v92 = vpack.c.bf16 %v91, %v91
  %v93 = vld [vmem:[%s3] sm:$0xf]
  %v94 = vld [vmem:[%s3 + $0x4] sm:$0xf]
  %v95 = vld [vmem:[%s3 + $0x8] sm:$0xf]
  %v96 = vld [vmem:[%s3 + $0xc] sm:$0xf]
  %v97 = vld [vmem:[%s3 + $0x10] sm:$0xf]
  %v98 = vld [vmem:[%s3 + $0x14] sm:$0xf]
  %v99 = vld [vmem:[%s3 + $0x18] sm:$0xf]
  %v100 = vld [vmem:[%s3 + $0x1c] sm:$0xf]
  %v101 = vld [vmem:[%s3 + $0x20] sm:$0xf]
  %v102 = vld [vmem:[%s3 + $0x24] sm:$0xf]
  %v103 = vld [vmem:[%s3 + $0x28] sm:$0xf]
  %v104 = vld [vmem:[%s3 + $0x2c] sm:$0xf]
  %v105 = vld [vmem:[%s3 + $0x30] sm:$0xf]
  %v106 = vld [vmem:[%s3 + $0x34] sm:$0xf]
  %v107 = vld [vmem:[%s3 + $0x38] sm:$0xf]
  %v108 = vld [vmem:[%s3 + $0x3c] sm:$0xf]
  %v109 = vld [vmem:[%s4] sm:$0x1]
  %v111 = vlaneseq
  %v112 = vshrl.u32 %v111, 7
  %v113 = vsub.s32 0, %v112
  %v114 = vrot.slane %v109, %v113
  %v132 = vunpack.c.l.b16 %v93
  %v133 = vunpack.c.l.b16 %v94
  %v134 = vunpack.c.l.b16 %v95
  %v135 = vunpack.c.l.b16 %v96
  %v136 = vunpack.c.l.b16 %v97
  %v137 = vunpack.c.l.b16 %v98
  %v138 = vunpack.c.l.b16 %v99
  %v139 = vunpack.c.l.b16 %v100
  %v140 = vunpack.c.l.b16 %v101
  %v141 = vunpack.c.l.b16 %v102
  %v142 = vunpack.c.l.b16 %v103
  %v143 = vunpack.c.l.b16 %v104
  %v144 = vunpack.c.l.b16 %v105
  %v145 = vunpack.c.l.b16 %v106
  %v146 = vunpack.c.l.b16 %v107
  %v147 = vunpack.c.l.b16 %v108
  %v148 = vpack.c.b16 %v133, %v132
  %v149 = vpack.c.b16 %v135, %v134
  %v150 = vpack.c.b16 %v137, %v136
  %v151 = vpack.c.b16 %v139, %v138
  %v152 = vpack.c.b16 %v141, %v140
  %v153 = vpack.c.b16 %v143, %v142
  %v154 = vpack.c.b16 %v145, %v144
  %v155 = vpack.c.b16 %v147, %v146
  %164 = vmatprep.subr.bf16.mxu0 0
  %165 = vmatpush1.bf16.msra.mxu0 %v148
  %166 = vmatprep.subr.bf16.mxu0 0
  %167 = vmatpush1.bf16.msra.mxu0 %v149
  %168 = vmatprep.subr.bf16.mxu0 0
  %169 = vmatpush1.bf16.msra.mxu0 %v150
  %170 = vmatprep.subr.bf16.mxu0 0
  %171 = vmatpush1.bf16.msra.mxu0 %v151
  %172 = vmatprep.subr.bf16.mxu0 0
  %173 = vmatpush1.bf16.msra.mxu0 %v152
  %174 = vmatprep.subr.bf16.mxu0 0
  %175 = vmatpush1.bf16.msra.mxu0 %v153
  %176 = vmatprep.subr.bf16.mxu0 0
  %177 = vmatpush1.bf16.msra.mxu0 %v154
  %178 = vmatprep.subr.bf16.mxu0 0
  %179 = vmatpush1.bf16.msra.mxu0 %v155
  %180 = vmatprep.subr.bf16.mxu0 0
  %181 = vmatpush1.bf16.msra.mxu0 0
  %182 = vmatprep.subr.bf16.mxu0 0
  %183 = vmatpush1.bf16.msra.mxu0 0
  %184 = vmatprep.subr.bf16.mxu0 0
  %185 = vmatpush1.bf16.msra.mxu0 0
  %186 = vmatprep.subr.bf16.mxu0 0
  %187 = vmatpush1.bf16.msra.mxu0 0
  %188 = vmatprep.subr.bf16.mxu0 0
  %189 = vmatpush1.bf16.msra.mxu0 0
  %190 = vmatprep.subr.bf16.mxu0 0
  %191 = vmatpush1.bf16.msra.mxu0 0
  %192 = vmatprep.subr.bf16.mxu0 0
  %193 = vmatpush1.bf16.msra.mxu0 0
  %194 = vmatprep.subr.bf16.mxu0 0
  %195 = vmatpush1.bf16.msra.mxu0 0
  %196 = vmatprep.mubr.bf16.mxu0 0
  %197 = vmatmul.mubr.bf16.gmra.mrb[0].mxu0 %v92
  %v198 = vpop.f32.mrb[0].mxu0
  %v199 = vadd.f32 %v114, %v198
  %v200 = vpop.f32.mrb[0].mxu0
  %v201 = vpop.f32.mrb[0].mxu0
  %v202 = vpop.f32.mrb[0].mxu0
  %203 = vdwg.mxu0
  %v204 = vmax.f32 %v199, 0.0
  %v205 = vld [vmem:[%s5] sm:$0xff]
  %v206 = vld [vmem:[%s5 + $0x8] sm:$0xff]
  %v207 = vld [vmem:[%s5 + $0x10] sm:$0xff]
  %v208 = vld [vmem:[%s5 + $0x18] sm:$0xff]
  %v209 = vld [vmem:[%s5 + $0x20] sm:$0xff]
  %v210 = vld [vmem:[%s5 + $0x28] sm:$0xff]
  %v211 = vld [vmem:[%s5 + $0x30] sm:$0xff]
  %v212 = vld [vmem:[%s5 + $0x38] sm:$0xff]
  %v213 = vld [vmem:[%s6] sm:$0x1]
  %v215 = vlaneseq
  %v216 = vshrl.u32 %v215, 7
  %v217 = vsub.s32 0, %v216
  %v218 = vrot.slane %v213, %v217
  %vm220 = vcmask 523264
  %v222 = vsel %vm220, %v204, 0
  %224 = vmatprep.subr.mxu0 0.0
  %225 = vmatpush1.msra.mxu0 %v205
  %226 = vmatprep.subr.mxu0 0.0
  %227 = vmatpush1.msra.mxu0 %v206
  %228 = vmatprep.subr.mxu0 0.0
  %229 = vmatpush1.msra.mxu0 %v207
  %230 = vmatprep.subr.mxu0 0.0
  %231 = vmatpush1.msra.mxu0 %v208
  %232 = vmatprep.subr.mxu0 0.0
  %233 = vmatpush1.msra.mxu0 %v209
  %234 = vmatprep.subr.mxu0 0.0
  %235 = vmatpush1.msra.mxu0 %v210
  %236 = vmatprep.subr.mxu0 0.0
  %237 = vmatpush1.msra.mxu0 %v211
  %238 = vmatprep.subr.mxu0 0.0
  %239 = vmatpush1.msra.mxu0 %v212
  %240 = vmatprep.subr.mxu0 0.0
  %241 = vmatpush1.msra.mxu0 0.0
  %242 = vmatprep.subr.mxu0 0.0
  %243 = vmatpush1.msra.mxu0 0.0
  %244 = vmatprep.subr.mxu0 0.0
  %245 = vmatpush1.msra.mxu0 0.0
  %246 = vmatprep.subr.mxu0 0.0
  %247 = vmatpush1.msra.mxu0 0.0
  %248 = vmatprep.subr.mxu0 0.0
  %249 = vmatpush1.msra.mxu0 0.0
  %250 = vmatprep.subr.mxu0 0.0
  %251 = vmatpush1.msra.mxu0 0.0
  %252 = vmatprep.subr.mxu0 0.0
  %253 = vmatpush1.msra.mxu0 0.0
  %254 = vmatprep.subr.mxu0 0.0
  %255 = vmatpush1.msra.mxu0 0.0
  %256 = vmatprep.subr.mxu0 0.0
  %257 = vmatpush1.msra.mxu0 0.0
  %258 = vmatprep.subr.mxu0 0.0
  %259 = vmatpush1.msra.mxu0 0.0
  %260 = vmatprep.subr.mxu0 0.0
  %261 = vmatpush1.msra.mxu0 0.0
  %262 = vmatprep.subr.mxu0 0.0
  %263 = vmatpush1.msra.mxu0 0.0
  %264 = vmatprep.subr.mxu0 0.0
  %265 = vmatpush1.msra.mxu0 0.0
  %266 = vmatprep.subr.mxu0 0.0
  %267 = vmatpush1.msra.mxu0 0.0
  %268 = vmatprep.subr.mxu0 0.0
  %269 = vmatpush1.msra.mxu0 0.0
  %270 = vmatprep.subr.mxu0 0.0
  %271 = vmatpush1.msra.mxu0 0.0
  %272 = vmatprep.subr.mxu0 0.0
  %273 = vmatpush1.msra.mxu0 0.0
  %274 = vmatprep.subr.mxu0 0.0
  %275 = vmatpush1.msra.mxu0 0.0
  %276 = vmatprep.subr.mxu0 0.0
  %277 = vmatpush1.msra.mxu0 0.0
  %278 = vmatprep.subr.mxu0 0.0
  %279 = vmatpush1.msra.mxu0 0.0
  %280 = vmatprep.subr.mxu0 0.0
  %281 = vmatpush1.msra.mxu0 0.0
  %282 = vmatprep.subr.mxu0 0.0
  %283 = vmatpush1.msra.mxu0 0.0
  %284 = vmatprep.subr.mxu0 0.0
  %285 = vmatpush1.msra.mxu0 0.0
  %286 = vmatprep.subr.mxu0 0.0
  %287 = vmatpush1.msra.mxu0 0.0
  %288 = vmatprep.mubr.f32.mxu0 0.0
  %289 = vmatmul.mubr.f32.gmra.mrb[0].mxu0 %v222
  %v290 = vpop.f32.mrb[0].mxu0
  %v291 = vadd.f32 %v218, %v290
  %v292 = vpop.f32.mrb[0].mxu0
  %293 = vdwg.mxu0
  %vm294 = vcmask 31744
  %v295 = vsel %vm294, %v291, -inf
  %296 = vmax.xlane.f32.xlu0 %v295
  %v297 = vpop.xlane.xlu0 %296
  %v298 = vsub.f32 %v291, %v297
  %v299 = vmul.f32 %v298, 1.442695
  %v300 = vpow.pop %v299
  %v301 = vsel %vm294, %v300, 0.0
  %302 = vadd.xlane.f32.xlu0 %v301
  %v303 = vpop.xlane.xlu0 %302
  %v304 = vrcp.pop %v303
  %v305 = vmul.f32 %v300, %v304
  %306 = vst.msk [vmem:[%s7] sm:$0xff] %vm294, %v305
  // Predicated region
  $region30: #{core_ai_model_forward.1} parent=0 // pred_check
    _
  $region31: #{core_ai_model_forward.1} parent=0 // pred_check_branch
    %308 = sbr.rel (0) target = $region33
  $region32: #{core_ai_model_forward.1} parent=0 // pred_region
    _
  $region33: #{core_ai_model_forward.1} parent=0 // pred_fallthru
    _
  // Predicated region
  $region34: #{core_ai_model_forward.1} parent=0 // pred_check
    _
  $region35: #{core_ai_model_forward.1} parent=0 // pred_check_branch
    %310 = sbr.rel (0) target = $region37
  $region36: #{core_ai_model_forward.1} parent=0 // pred_region
    _
  $region37: #{core_ai_model_forward.1} parent=0 // pred_fallthru
    _

</llo_original>
